<compile_context>
chip_gen: v5e
topology: v5e:2x2
jax: 0.10.0
libtpu: 0.0.40
codegen_flags: <defaults>
</compile_context>

<pallas_src>
import functools

import jax
import jax.numpy as jnp
from jax import lax
from jax.experimental import pallas as pl
from jax.experimental.pallas import tpu as pltpu


def _layer_norm(x, w, b, eps):
    mu = jnp.mean(x, axis=-1, keepdims=True)
    var = jnp.mean(jnp.square(x - mu), axis=-1, keepdims=True)
    return (x - mu) * lax.rsqrt(var + eps) * w + b


def _mha_kernel(x_ref, wq_ref, bq_ref, wkv_ref, bkv_ref, wo_ref,
                lnw_ref, lnb_ref, o_ref, kv_scr, av_scr,
                *, n_head, d_head, tq, pre_lnorm, ln_eps):
    qi = pl.program_id(1)
    hdh = n_head * d_head

    # ---- Fused K/V projection over the full sequence: once per batch elt ----
    @pl.when(qi == 0)
    def _():
        xf = x_ref[0].astype(jnp.float32)                        # (T, D)
        if pre_lnorm:
            xf = _layer_norm(xf, lnw_ref[...], lnb_ref[...], ln_eps)
        xb = xf.astype(jnp.bfloat16)
        kv = jnp.dot(xb, wkv_ref[...],
                     preferred_element_type=jnp.float32) + bkv_ref[...]
        kv_scr[...] = kv.astype(jnp.bfloat16)                    # (T, 2*H*Dh)

    # ---- Query tile ----
    q_start = pl.multiple_of(qi * tq, tq)
    xq = x_ref[0, pl.ds(q_start, tq), :].astype(jnp.float32)     # (TQ, D)
    residual = xq
    if pre_lnorm:
        xq = _layer_norm(xq, lnw_ref[...], lnb_ref[...], ln_eps)
    xqb = xq.astype(jnp.bfloat16)

    # Fused Q projection across heads (scale folded into wq/bq in the wrapper).
    q_all = (jnp.dot(xqb, wq_ref[...], preferred_element_type=jnp.float32)
             + bq_ref[...]).astype(jnp.bfloat16)                 # (TQ, H*Dh)

    # ---- Per-head attention (static lane slices of lane-dense slabs) -------
    for h in range(n_head):
        lo = h * d_head
        hi = lo + d_head
        qh = q_all[:, lo:hi]                                     # (TQ, Dh) bf16
        kh = kv_scr[:, lo:hi]                                    # (T, Dh)  bf16
        vh = kv_scr[:, hdh + lo:hdh + hi]                        # (T, Dh)  bf16

        # q @ k^T: contract the last dims directly (no materialized transpose).
        s = lax.dot_general(qh, kh, (((1,), (1,)), ((), ())),
                            preferred_element_type=jnp.float32)  # (TQ, T) f32
        m = jnp.max(s, axis=-1, keepdims=True)
        # exp in bf16 (EUP) — row-sum (softmax denominator) kept in f32.
        p = jnp.exp((s - m).astype(jnp.bfloat16))                # (TQ, T) bf16
        l = jnp.sum(p.astype(jnp.float32), axis=-1, keepdims=True)

        av = jnp.dot(p, vh, preferred_element_type=jnp.float32)  # (TQ, Dh) f32
        # Deferred softmax normalization: scale the small (TQ, Dh) result.
        av = av * pl.reciprocal(l, approx=True)
        av_scr[:, lo:hi] = av.astype(jnp.bfloat16)

    # ---- Fused output projection: single (TQ, H*Dh) @ (H*Dh, D) matmul -----
    attn_out = jnp.dot(av_scr[...], wo_ref[...],
                       preferred_element_type=jnp.float32)       # (TQ, D)

    pre = residual + attn_out
    if pre_lnorm:
        out = pre
    else:
        out = _layer_norm(pre, lnw_ref[...], lnb_ref[...], ln_eps)
    o_ref[0] = out.astype(o_ref.dtype)


def _pick_q_tile(T):
    """Largest divisor of T that is a multiple of 8 and <= 256, else T."""
    best = None
    for cand in range(8, min(256, T) + 1, 8):
        if T % cand == 0:
            best = cand
    return best if best is not None else T


def multi_head_attn(inp, w_qkv, b_qkv, w_o, ln_w, ln_b, *,
                    n_head, d_head, pre_lnorm=False, ln_eps=1e-5, q_tile=None):
    """inp: (B, T, d_model). Weights in PyTorch nn.Linear convention:
       w_qkv: (3*n_head*d_head, d_model), b_qkv: (3*n_head*d_head,),
       w_o:   (d_model, n_head*d_head), ln_w/ln_b: (d_model,)."""
    B, T, D = inp.shape
    hdh = n_head * d_head
    scale = 1.0 / (d_head ** 0.5)

    # ---- one-time parameter repacking (plain JAX glue) -------------------
    w = jnp.asarray(w_qkv, jnp.float32)
    b = jnp.asarray(b_qkv, jnp.float32)

    # nn.Linear computes x @ W.T + b; pack as (D, features), lane-dense, with
    # lane order f = h*d_head + d (matches the module's head view/reshape).
    wq = (w[:hdh].T * scale).astype(jnp.bfloat16)                # (D, H*Dh)
    wkv = w[hdh:].T.astype(jnp.bfloat16)                         # (D, 2*H*Dh)
    bq = (b[:hdh] * scale).reshape(1, hdh)
    bkv = b[hdh:].reshape(1, 2 * hdh)
    wo = jnp.asarray(w_o, jnp.float32).T.astype(jnp.bfloat16)    # (H*Dh, D)
    lnw = jnp.asarray(ln_w, jnp.float32).reshape(1, D)
    lnb = jnp.asarray(ln_b, jnp.float32).reshape(1, D)

    if q_tile is None:
        q_tile = _pick_q_tile(T)
    assert T % q_tile == 0, "q_tile must divide T"
    n_q = T // q_tile

    # Generation-aware VMEM ceiling with ~30% headroom (v7x: 64 MiB per TC).
    try:
        cap = getattr(pltpu.get_tpu_info(), "vmem_capacity_bytes", None)
        vmem_limit = int(cap * 0.7) if cap else None
    except Exception:  # pragma: no cover - fall back to compiler default
        vmem_limit = None

    kernel = functools.partial(_mha_kernel, n_head=n_head, d_head=d_head,
                               tq=q_tile, pre_lnorm=pre_lnorm, ln_eps=ln_eps)

    def const_spec(shape):
        return pl.BlockSpec(shape, lambda bb, qq: (0,) * len(shape))

    return pl.pallas_call(
        kernel,
        out_shape=jax.ShapeDtypeStruct((B, T, D), inp.dtype),
        grid_spec=pltpu.PrefetchScalarGridSpec(
            num_scalar_prefetch=0,
            grid=(B, n_q),
            in_specs=[
                pl.BlockSpec((1, T, D), lambda bb, qq: (bb, 0, 0)),  # x (full seq)
                const_spec((D, hdh)),        # w_q (scale folded in)
                const_spec((1, hdh)),        # b_q (scale folded in)
                const_spec((D, 2 * hdh)),    # w_kv
                const_spec((1, 2 * hdh)),    # b_kv
                const_spec((hdh, D)),        # w_o
                const_spec((1, D)),          # ln weight
                const_spec((1, D)),          # ln bias
            ],
            out_specs=pl.BlockSpec((1, q_tile, D), lambda bb, qq: (bb, qq, 0)),
            scratch_shapes=[
                pltpu.VMEM((T, 2 * hdh), jnp.bfloat16),    # K|V cache (lane-dense)
                pltpu.VMEM((q_tile, hdh), jnp.bfloat16),   # av staging for fused o_net
            ]),
        compiler_params=pltpu.CompilerParams(
            dimension_semantics=("parallel", "arbitrary"),
            vmem_limit_bytes=vmem_limit),
    )(inp, wq, bq, wkv, bkv, wo, lnw, lnb)


def _reference(inp, w_qkv, b_qkv, w_o, ln_w, ln_b, *,
               n_head, d_head, pre_lnorm=False, ln_eps=1e-5):
    """Pure-JAX f32 replica of the PyTorch _forward (eval mode, no mask)."""
    B, T, D = inp.shape
    scale = 1.0 / (d_head ** 0.5)
    residual = inp
    x = inp
    if pre_lnorm:
        mu = jnp.mean(x, -1, keepdims=True)
        var = jnp.mean((x - mu) ** 2, -1, keepdims=True)
        x = (x - mu) / jnp.sqrt(var + ln_eps) * ln_w + ln_b
    qkv = x @ w_qkv.T + b_qkv                                # (B, T, 3*H*Dh)
    hq, hk, hv = jnp.split(qkv, 3, axis=2)

    def to_heads(a):
        a = a.reshape(B, T, n_head, d_head)
        return jnp.transpose(a, (2, 0, 1, 3)).reshape(-1, T, d_head)

    q, k, v = to_heads(hq), to_heads(hk), to_heads(hv)
    s = jnp.einsum('btd,bsd->bts', q, k) * scale
    p = jax.nn.softmax(s, axis=2)
    av = jnp.einsum('bts,bsd->btd', p, v)
    av = av.reshape(n_head, B, T, d_head)
    av = jnp.transpose(av, (1, 2, 0, 3)).reshape(B, T, n_head * d_head)
    attn_out = av @ w_o.T
    if pre_lnorm:
        return residual + attn_out
    pre = residual + attn_out
    mu = jnp.mean(pre, -1, keepdims=True)
    var = jnp.mean((pre - mu) ** 2, -1, keepdims=True)
    return (pre - mu) / jnp.sqrt(var + ln_eps) * ln_w + ln_b


if __name__ == "__main__":
    # Small, module-consistent shapes.
    B, T = 2, 16
    n_head, d_model, d_head = 4, 64, 16

    key = jax.random.PRNGKey(0)
    k_inp, k_wqkv, k_bqkv, k_wo, k_lnw, k_lnb = jax.random.split(key, 6)

    inp = jax.random.normal(k_inp, (B, T, d_model), jnp.float32)
    w_qkv = 0.1 * jax.random.normal(k_wqkv, (3 * n_head * d_head, d_model),
                                    jnp.float32)
    b_qkv = 0.1 * jax.random.normal(k_bqkv, (3 * n_head * d_head,), jnp.float32)
    w_o = 0.1 * jax.random.normal(k_wo, (d_model, n_head * d_head), jnp.float32)
    ln_w = 1.0 + 0.05 * jax.random.normal(k_lnw, (d_model,), jnp.float32)
    ln_b = 0.05 * jax.random.normal(k_lnb, (d_model,), jnp.float32)

    # bf16 MXU operands + bf16 softmax exp + approx reciprocal => compare with
    # a slightly relaxed absolute tolerance against the f32 reference.
    TOL = 5e-2

    # Post-norm (module default), auto q_tile.
    out = multi_head_attn(inp, w_qkv, b_qkv, w_o, ln_w, ln_b,
                          n_head=n_head, d_head=d_head, pre_lnorm=False)
    out = jax.block_until_ready(out)
    ref = _reference(inp, w_qkv, b_qkv, w_o, ln_w, ln_b,
                     n_head=n_head, d_head=d_head, pre_lnorm=False)
    assert out.shape == (B, T, d_model)
    err = float(jnp.max(jnp.abs(out - ref)))
    assert err < TOL, f"post-norm max abs err {err}"

    # Pre-norm with multiple query tiles (exercises the K/V scratch reuse).
    out2 = multi_head_attn(inp, w_qkv, b_qkv, w_o, ln_w, ln_b,
                           n_head=n_head, d_head=d_head, pre_lnorm=True,
                           q_tile=8)
    out2 = jax.block_until_ready(out2)
    ref2 = _reference(inp, w_qkv, b_qkv, w_o, ln_w, ln_b,
                      n_head=n_head, d_head=d_head, pre_lnorm=True)
    err2 = float(jnp.max(jnp.abs(out2 - ref2)))
    assert err2 < TOL, f"pre-norm max abs err {err2}"

    print("KERNEL_OK")
</pallas_src>

<mosaic_0001>
module attributes {stable_mosaic.version = 11 : i64} {
  func.func @_mha_kernel(%arg0: i32, %arg1: i32, %arg2: memref<1x16x64xf32, #tpu.memory_space<vmem>>, %arg3: memref<64x64xbf16, #tpu.memory_space<vmem>>, %arg4: memref<1x64xf32, #tpu.memory_space<vmem>>, %arg5: memref<64x128xbf16, #tpu.memory_space<vmem>>, %arg6: memref<1x128xf32, #tpu.memory_space<vmem>>, %arg7: memref<64x64xbf16, #tpu.memory_space<vmem>>, %arg8: memref<1x64xf32, #tpu.memory_space<vmem>>, %arg9: memref<1x64xf32, #tpu.memory_space<vmem>>, %arg10: memref<1x16x64xf32, #tpu.memory_space<vmem>>, %arg11: memref<16x128xbf16, #tpu.memory_space<vmem>>, %arg12: memref<16x64xbf16, #tpu.memory_space<vmem>>) attributes {dimension_semantics = [#tpu.dimension_semantics<parallel>, #tpu.dimension_semantics<arbitrary>], iteration_bounds = array<i64: 2, 1>, scalar_prefetch = 0 : i64, scratch_operands = 2 : i64, tpu.core_type = #tpu.core_type<tc>, window_params = [{transform_indices = @transform_0, window_bounds = array<i64: 1, 16, 64>}, {pipeline_mode = #tpu.pipeline_mode<synchronous>, transform_indices = @transform_1, window_bounds = array<i64: 64, 64>}, {pipeline_mode = #tpu.pipeline_mode<synchronous>, transform_indices = @transform_2, window_bounds = array<i64: 1, 64>}, {pipeline_mode = #tpu.pipeline_mode<synchronous>, transform_indices = @transform_3, window_bounds = array<i64: 64, 128>}, {pipeline_mode = #tpu.pipeline_mode<synchronous>, transform_indices = @transform_4, window_bounds = array<i64: 1, 128>}, {pipeline_mode = #tpu.pipeline_mode<synchronous>, transform_indices = @transform_5, window_bounds = array<i64: 64, 64>}, {pipeline_mode = #tpu.pipeline_mode<synchronous>, transform_indices = @transform_6, window_bounds = array<i64: 1, 64>}, {pipeline_mode = #tpu.pipeline_mode<synchronous>, transform_indices = @transform_7, window_bounds = array<i64: 1, 64>}, {transform_indices = @transform_8, window_bounds = array<i64: 1, 16, 64>}]} {
    %c0_i32 = arith.constant 0 : i32
    %0 = arith.cmpi eq, %arg1, %c0_i32 : i32
    %1 = arith.extui %0 : i1 to i32
    %c0_i32_0 = arith.constant 0 : i32
    %2 = arith.cmpi ne, %1, %c0_i32_0 : i32
    scf.if %2 {
      %c0_56 = arith.constant 0 : index
      %c0_57 = arith.constant 0 : index
      %c0_58 = arith.constant 0 : index
      %122 = vector.load %arg2[%c0_56, %c0_57, %c0_58] : memref<1x16x64xf32, #tpu.memory_space<vmem>>, vector<1x16x64xf32>
      %123 = vector.shape_cast %122 : vector<1x16x64xf32> to vector<16x64xf32>
      %124 = arith.truncf %123 : vector<16x64xf32> to vector<16x64xbf16>
      %c0_59 = arith.constant 0 : index
      %c0_60 = arith.constant 0 : index
      %125 = vector.load %arg5[%c0_59, %c0_60] : memref<64x128xbf16, #tpu.memory_space<vmem>>, vector<64x128xbf16>
      %cst_61 = arith.constant dense<0.000000e+00> : vector<16x128xf32>
      %126 = tpu.matmul %124, %125, %cst_61 {dimension_numbers = #tpu.dot_dimension_numbers<[1], [0], [0], [1], [0, 0, 1, 1], [], []>} : vector<16x64xbf16>, vector<64x128xbf16>, vector<16x128xf32> -> vector<16x128xf32>
      %c0_62 = arith.constant 0 : index
      %c0_63 = arith.constant 0 : index
      %127 = vector.load %arg6[%c0_62, %c0_63] : memref<1x128xf32, #tpu.memory_space<vmem>>, vector<1x128xf32>
      %128 = vector.broadcast %127 : vector<1x128xf32> to vector<16x128xf32>
      %129 = arith.addf %126, %128 : vector<16x128xf32>
      %130 = arith.truncf %129 : vector<16x128xf32> to vector<16x128xbf16>
      %c0_64 = arith.constant 0 : index
      %c0_65 = arith.constant 0 : index
      %131 = vector.load %arg11[%c0_64, %c0_65] : memref<16x128xbf16, #tpu.memory_space<vmem>>, vector<16x128xbf16>
      tpu.vector_store %arg11[%c0_64, %c0_65], %130 {strides = array<i32>} : memref<16x128xbf16, #tpu.memory_space<vmem>>, vector<16x128xbf16>,
    } else {
    }
    %c16_i32 = arith.constant 16 : i32
    %3 = arith.muli %arg1, %c16_i32 : i32
    %4 = tpu.assume_multiple %3, 16 : i32
    %c0 = arith.constant 0 : index
    %5 = arith.index_cast %4 : i32 to index
    %c0_1 = arith.constant 0 : index
    %6 = vector.load %arg2[%c0, %5, %c0_1] : memref<1x16x64xf32, #tpu.memory_space<vmem>>, vector<1x16x64xf32>
    %7 = vector.shape_cast %6 : vector<1x16x64xf32> to vector<16x64xf32>
    %8 = arith.truncf %7 : vector<16x64xf32> to vector<16x64xbf16>
    %c0_2 = arith.constant 0 : index
    %c0_3 = arith.constant 0 : index
    %9 = vector.load %arg3[%c0_2, %c0_3] : memref<64x64xbf16, #tpu.memory_space<vmem>>, vector<64x64xbf16>
    %cst = arith.constant dense<0.000000e+00> : vector<16x64xf32>
    %10 = tpu.matmul %8, %9, %cst {dimension_numbers = #tpu.dot_dimension_numbers<[1], [0], [0], [1], [0, 0, 1, 1], [], []>} : vector<16x64xbf16>, vector<64x64xbf16>, vector<16x64xf32> -> vector<16x64xf32>
    %c0_4 = arith.constant 0 : index
    %c0_5 = arith.constant 0 : index
    %11 = vector.load %arg4[%c0_4, %c0_5] : memref<1x64xf32, #tpu.memory_space<vmem>>, vector<1x64xf32>
    %12 = vector.broadcast %11 : vector<1x64xf32> to vector<16x64xf32>
    %13 = arith.addf %10, %12 : vector<16x64xf32>
    %14 = arith.truncf %13 : vector<16x64xf32> to vector<16x64xbf16>
    %15 = vector.extract_strided_slice %14 {offsets = [0, 0], sizes = [16, 16], strides = [1, 1]} : vector<16x64xbf16> to vector<16x16xbf16>
    %c0_6 = arith.constant 0 : index
    %c0_7 = arith.constant 0 : index
    %16 = vector.load %arg11[%c0_6, %c0_7] : memref<16x128xbf16, #tpu.memory_space<vmem>>, vector<16x16xbf16>
    %c0_8 = arith.constant 0 : index
    %c64 = arith.constant 64 : index
    %17 = vector.load %arg11[%c0_8, %c64] : memref<16x128xbf16, #tpu.memory_space<vmem>>, vector<16x16xbf16>
    %cst_9 = arith.constant dense<0.000000e+00> : vector<16x16xf32>
    %18 = tpu.matmul %15, %16, %cst_9 {dimension_numbers = #tpu.dot_dimension_numbers<[1], [1], [0], [0], [0, 0, 1, 0], [], []>} : vector<16x16xbf16>, vector<16x16xbf16>, vector<16x16xf32> -> vector<16x16xf32>
    %cst_10 = arith.constant dense<0xFF800000> : vector<16xf32>
    %19 = vector.multi_reduction <maximumf>, %18, %cst_10 [1] : vector<16x16xf32> to vector<16xf32>
    %20 = vector.shape_cast %19 : vector<16xf32> to vector<16x1xf32>
    %21 = vector.broadcast %20 : vector<16x1xf32> to vector<16x16xf32>
    %22 = arith.subf %18, %21 : vector<16x16xf32>
    %23 = arith.truncf %22 : vector<16x16xf32> to vector<16x16xbf16>
    %24 = math.exp %23 : vector<16x16xbf16>
    %25 = arith.extf %24 : vector<16x16xbf16> to vector<16x16xf32>
    %cst_11 = arith.constant dense<0.000000e+00> : vector<16xf32>
    %26 = vector.multi_reduction <add>, %25, %cst_11 [1] : vector<16x16xf32> to vector<16xf32>
    %27 = vector.shape_cast %26 : vector<16xf32> to vector<16x1xf32>
    %cst_12 = arith.constant dense<0.000000e+00> : vector<16x16xf32>
    %28 = tpu.matmul %24, %17, %cst_12 {dimension_numbers = #tpu.dot_dimension_numbers<[1], [0], [0], [1], [0, 0, 1, 1], [], []>} : vector<16x16xbf16>, vector<16x16xbf16>, vector<16x16xf32> -> vector<16x16xf32>
    %29 = tpu.reciprocal %27 {approx = true} : vector<16x1xf32> -> vector<16x1xf32>
    %30 = vector.broadcast %29 : vector<16x1xf32> to vector<16x16xf32>
    %31 = arith.mulf %28, %30 : vector<16x16xf32>
    %32 = arith.truncf %31 : vector<16x16xf32> to vector<16x16xbf16>
    %c0_13 = arith.constant 0 : index
    %c0_14 = arith.constant 0 : index
    %33 = vector.load %arg12[%c0_13, %c0_14] : memref<16x64xbf16, #tpu.memory_space<vmem>>, vector<16x16xbf16>
    tpu.vector_store %arg12[%c0_13, %c0_14], %32 {strides = array<i32>} : memref<16x64xbf16, #tpu.memory_space<vmem>>, vector<16x16xbf16>,
    %34 = vector.extract_strided_slice %14 {offsets = [0, 16], sizes = [16, 16], strides = [1, 1]} : vector<16x64xbf16> to vector<16x16xbf16>
    %c0_15 = arith.constant 0 : index
    %c16 = arith.constant 16 : index
    %35 = vector.load %arg11[%c0_15, %c16] : memref<16x128xbf16, #tpu.memory_space<vmem>>, vector<16x16xbf16>
    %c0_16 = arith.constant 0 : index
    %c80 = arith.constant 80 : index
    %36 = vector.load %arg11[%c0_16, %c80] : memref<16x128xbf16, #tpu.memory_space<vmem>>, vector<16x16xbf16>
    %cst_17 = arith.constant dense<0.000000e+00> : vector<16x16xf32>
    %37 = tpu.matmul %34, %35, %cst_17 {dimension_numbers = #tpu.dot_dimension_numbers<[1], [1], [0], [0], [0, 0, 1, 0], [], []>} : vector<16x16xbf16>, vector<16x16xbf16>, vector<16x16xf32> -> vector<16x16xf32>
    %cst_18 = arith.constant dense<0xFF800000> : vector<16xf32>
    %38 = vector.multi_reduction <maximumf>, %37, %cst_18 [1] : vector<16x16xf32> to vector<16xf32>
    %39 = vector.shape_cast %38 : vector<16xf32> to vector<16x1xf32>
    %40 = vector.broadcast %39 : vector<16x1xf32> to vector<16x16xf32>
    %41 = arith.subf %37, %40 : vector<16x16xf32>
    %42 = arith.truncf %41 : vector<16x16xf32> to vector<16x16xbf16>
    %43 = math.exp %42 : vector<16x16xbf16>
    %44 = arith.extf %43 : vector<16x16xbf16> to vector<16x16xf32>
    %cst_19 = arith.constant dense<0.000000e+00> : vector<16xf32>
    %45 = vector.multi_reduction <add>, %44, %cst_19 [1] : vector<16x16xf32> to vector<16xf32>
    %46 = vector.shape_cast %45 : vector<16xf32> to vector<16x1xf32>
    %cst_20 = arith.constant dense<0.000000e+00> : vector<16x16xf32>
    %47 = tpu.matmul %43, %36, %cst_20 {dimension_numbers = #tpu.dot_dimension_numbers<[1], [0], [0], [1], [0, 0, 1, 1], [], []>} : vector<16x16xbf16>, vector<16x16xbf16>, vector<16x16xf32> -> vector<16x16xf32>
    %48 = tpu.reciprocal %46 {approx = true} : vector<16x1xf32> -> vector<16x1xf32>
    %49 = vector.broadcast %48 : vector<16x1xf32> to vector<16x16xf32>
    %50 = arith.mulf %47, %49 : vector<16x16xf32>
    %51 = arith.truncf %50 : vector<16x16xf32> to vector<16x16xbf16>
    %c0_21 = arith.constant 0 : index
    %c16_22 = arith.constant 16 : index
    %52 = vector.load %arg12[%c0_21, %c16_22] : memref<16x64xbf16, #tpu.memory_space<vmem>>, vector<16x16xbf16>
    tpu.vector_store %arg12[%c0_21, %c16_22], %51 {strides = array<i32>} : memref<16x64xbf16, #tpu.memory_space<vmem>>, vector<16x16xbf16>,
    %53 = vector.extract_strided_slice %14 {offsets = [0, 32], sizes = [16, 16], strides = [1, 1]} : vector<16x64xbf16> to vector<16x16xbf16>
    %c0_23 = arith.constant 0 : index
    %c32 = arith.constant 32 : index
    %54 = vector.load %arg11[%c0_23, %c32] : memref<16x128xbf16, #tpu.memory_space<vmem>>, vector<16x16xbf16>
    %c0_24 = arith.constant 0 : index
    %c96 = arith.constant 96 : index
    %55 = vector.load %arg11[%c0_24, %c96] : memref<16x128xbf16, #tpu.memory_space<vmem>>, vector<16x16xbf16>
    %cst_25 = arith.constant dense<0.000000e+00> : vector<16x16xf32>
    %56 = tpu.matmul %53, %54, %cst_25 {dimension_numbers = #tpu.dot_dimension_numbers<[1], [1], [0], [0], [0, 0, 1, 0], [], []>} : vector<16x16xbf16>, vector<16x16xbf16>, vector<16x16xf32> -> vector<16x16xf32>
    %cst_26 = arith.constant dense<0xFF800000> : vector<16xf32>
    %57 = vector.multi_reduction <maximumf>, %56, %cst_26 [1] : vector<16x16xf32> to vector<16xf32>
    %58 = vector.shape_cast %57 : vector<16xf32> to vector<16x1xf32>
    %59 = vector.broadcast %58 : vector<16x1xf32> to vector<16x16xf32>
    %60 = arith.subf %56, %59 : vector<16x16xf32>
    %61 = arith.truncf %60 : vector<16x16xf32> to vector<16x16xbf16>
    %62 = math.exp %61 : vector<16x16xbf16>
    %63 = arith.extf %62 : vector<16x16xbf16> to vector<16x16xf32>
    %cst_27 = arith.constant dense<0.000000e+00> : vector<16xf32>
    %64 = vector.multi_reduction <add>, %63, %cst_27 [1] : vector<16x16xf32> to vector<16xf32>
    %65 = vector.shape_cast %64 : vector<16xf32> to vector<16x1xf32>
    %cst_28 = arith.constant dense<0.000000e+00> : vector<16x16xf32>
    %66 = tpu.matmul %62, %55, %cst_28 {dimension_numbers = #tpu.dot_dimension_numbers<[1], [0], [0], [1], [0, 0, 1, 1], [], []>} : vector<16x16xbf16>, vector<16x16xbf16>, vector<16x16xf32> -> vector<16x16xf32>
    %67 = tpu.reciprocal %65 {approx = true} : vector<16x1xf32> -> vector<16x1xf32>
    %68 = vector.broadcast %67 : vector<16x1xf32> to vector<16x16xf32>
    %69 = arith.mulf %66, %68 : vector<16x16xf32>
    %70 = arith.truncf %69 : vector<16x16xf32> to vector<16x16xbf16>
    %c0_29 = arith.constant 0 : index
    %c32_30 = arith.constant 32 : index
    %71 = vector.load %arg12[%c0_29, %c32_30] : memref<16x64xbf16, #tpu.memory_space<vmem>>, vector<16x16xbf16>
    tpu.vector_store %arg12[%c0_29, %c32_30], %70 {strides = array<i32>} : memref<16x64xbf16, #tpu.memory_space<vmem>>, vector<16x16xbf16>,
    %72 = vector.extract_strided_slice %14 {offsets = [0, 48], sizes = [16, 16], strides = [1, 1]} : vector<16x64xbf16> to vector<16x16xbf16>
    %c0_31 = arith.constant 0 : index
    %c48 = arith.constant 48 : index
    %73 = vector.load %arg11[%c0_31, %c48] : memref<16x128xbf16, #tpu.memory_space<vmem>>, vector<16x16xbf16>
    %c0_32 = arith.constant 0 : index
    %c112 = arith.constant 112 : index
    %74 = vector.load %arg11[%c0_32, %c112] : memref<16x128xbf16, #tpu.memory_space<vmem>>, vector<16x16xbf16>
    %cst_33 = arith.constant dense<0.000000e+00> : vector<16x16xf32>
    %75 = tpu.matmul %72, %73, %cst_33 {dimension_numbers = #tpu.dot_dimension_numbers<[1], [1], [0], [0], [0, 0, 1, 0], [], []>} : vector<16x16xbf16>, vector<16x16xbf16>, vector<16x16xf32> -> vector<16x16xf32>
    %cst_34 = arith.constant dense<0xFF800000> : vector<16xf32>
    %76 = vector.multi_reduction <maximumf>, %75, %cst_34 [1] : vector<16x16xf32> to vector<16xf32>
    %77 = vector.shape_cast %76 : vector<16xf32> to vector<16x1xf32>
    %78 = vector.broadcast %77 : vector<16x1xf32> to vector<16x16xf32>
    %79 = arith.subf %75, %78 : vector<16x16xf32>
    %80 = arith.truncf %79 : vector<16x16xf32> to vector<16x16xbf16>
    %81 = math.exp %80 : vector<16x16xbf16>
    %82 = arith.extf %81 : vector<16x16xbf16> to vector<16x16xf32>
    %cst_35 = arith.constant dense<0.000000e+00> : vector<16xf32>
    %83 = vector.multi_reduction <add>, %82, %cst_35 [1] : vector<16x16xf32> to vector<16xf32>
    %84 = vector.shape_cast %83 : vector<16xf32> to vector<16x1xf32>
    %cst_36 = arith.constant dense<0.000000e+00> : vector<16x16xf32>
    %85 = tpu.matmul %81, %74, %cst_36 {dimension_numbers = #tpu.dot_dimension_numbers<[1], [0], [0], [1], [0, 0, 1, 1], [], []>} : vector<16x16xbf16>, vector<16x16xbf16>, vector<16x16xf32> -> vector<16x16xf32>
    %86 = tpu.reciprocal %84 {approx = true} : vector<16x1xf32> -> vector<16x1xf32>
    %87 = vector.broadcast %86 : vector<16x1xf32> to vector<16x16xf32>
    %88 = arith.mulf %85, %87 : vector<16x16xf32>
    %89 = arith.truncf %88 : vector<16x16xf32> to vector<16x16xbf16>
    %c0_37 = arith.constant 0 : index
    %c48_38 = arith.constant 48 : index
    %90 = vector.load %arg12[%c0_37, %c48_38] : memref<16x64xbf16, #tpu.memory_space<vmem>>, vector<16x16xbf16>
    tpu.vector_store %arg12[%c0_37, %c48_38], %89 {strides = array<i32>} : memref<16x64xbf16, #tpu.memory_space<vmem>>, vector<16x16xbf16>,
    %c0_39 = arith.constant 0 : index
    %c0_40 = arith.constant 0 : index
    %91 = vector.load %arg12[%c0_39, %c0_40] : memref<16x64xbf16, #tpu.memory_space<vmem>>, vector<16x64xbf16>
    %c0_41 = arith.constant 0 : index
    %c0_42 = arith.constant 0 : index
    %92 = vector.load %arg7[%c0_41, %c0_42] : memref<64x64xbf16, #tpu.memory_space<vmem>>, vector<64x64xbf16>
    %cst_43 = arith.constant dense<0.000000e+00> : vector<16x64xf32>
    %93 = tpu.matmul %91, %92, %cst_43 {dimension_numbers = #tpu.dot_dimension_numbers<[1], [0], [0], [1], [0, 0, 1, 1], [], []>} : vector<16x64xbf16>, vector<64x64xbf16>, vector<16x64xf32> -> vector<16x64xf32>
    %94 = arith.addf %7, %93 : vector<16x64xf32>
    %c0_44 = arith.constant 0 : index
    %c0_45 = arith.constant 0 : index
    %95 = vector.load %arg8[%c0_44, %c0_45] : memref<1x64xf32, #tpu.memory_space<vmem>>, vector<1x64xf32>
    %c0_46 = arith.constant 0 : index
    %c0_47 = arith.constant 0 : index
    %96 = vector.load %arg9[%c0_46, %c0_47] : memref<1x64xf32, #tpu.memory_space<vmem>>, vector<1x64xf32>
    %cst_48 = arith.constant dense<0.000000e+00> : vector<16xf32>
    %97 = vector.multi_reduction <add>, %94, %cst_48 [1] : vector<16x64xf32> to vector<16xf32>
    %98 = vector.shape_cast %97 : vector<16xf32> to vector<16x1xf32>
    %cst_49 = arith.constant 6.400000e+01 : f32
    %99 = vector.broadcast %cst_49 : f32 to vector<16x1xf32>
    %100 = arith.divf %98, %99 : vector<16x1xf32>
    %101 = vector.broadcast %100 : vector<16x1xf32> to vector<16x64xf32>
    %102 = arith.subf %94, %101 : vector<16x64xf32>
    %103 = arith.mulf %102, %102 : vector<16x64xf32>
    %cst_50 = arith.constant dense<0.000000e+00> : vector<16xf32>
    %104 = vector.multi_reduction <add>, %103, %cst_50 [1] : vector<16x64xf32> to vector<16xf32>
    %105 = vector.shape_cast %104 : vector<16xf32> to vector<16x1xf32>
    %cst_51 = arith.constant 6.400000e+01 : f32
    %106 = vector.broadcast %cst_51 : f32 to vector<16x1xf32>
    %107 = arith.divf %105, %106 : vector<16x1xf32>
    %108 = vector.broadcast %100 : vector<16x1xf32> to vector<16x64xf32>
    %109 = arith.subf %94, %108 : vector<16x64xf32>
    %cst_52 = arith.constant 9.99999974E-6 : f32
    %110 = vector.broadcast %cst_52 : f32 to vector<16x1xf32>
    %111 = arith.addf %107, %110 : vector<16x1xf32>
    %112 = math.rsqrt %111 : vector<16x1xf32>
    %113 = vector.broadcast %112 : vector<16x1xf32> to vector<16x64xf32>
    %114 = arith.mulf %109, %113 : vector<16x64xf32>
    %115 = vector.broadcast %95 : vector<1x64xf32> to vector<16x64xf32>
    %116 = arith.mulf %114, %115 : vector<16x64xf32>
    %117 = vector.broadcast %96 : vector<1x64xf32> to vector<16x64xf32>
    %118 = arith.addf %116, %117 : vector<16x64xf32>
    %c0_53 = arith.constant 0 : index
    %c0_54 = arith.constant 0 : index
    %c0_55 = arith.constant 0 : index
    %119 = vector.load %arg10[%c0_53, %c0_54, %c0_55] : memref<1x16x64xf32, #tpu.memory_space<vmem>>, vector<1x16x64xf32>
    %120 = vector.shape_cast %119 : vector<1x16x64xf32> to vector<16x64xf32>
    %121 = vector.shape_cast %118 : vector<16x64xf32> to vector<1x16x64xf32>
    tpu.vector_store %arg10[%c0_53, %c0_54, %c0_55], %121 {strides = array<i32>} : memref<1x16x64xf32, #tpu.memory_space<vmem>>, vector<1x16x64xf32>,
    return
  }
  func.func @transform_0(%arg0: i32, %arg1: i32) -> (i32, i32, i32) {
    %c0_i32 = arith.constant 0 : i32
    %c0_i32_0 = arith.constant 0 : i32
    %c0_i32_1 = arith.constant 0 : i32
    return %arg0, %c0_i32, %c0_i32_0 : i32, i32, i32
  }
  func.func @transform_1(%arg0: i32, %arg1: i32) -> (i32, i32) {
    %c0_i32 = arith.constant 0 : i32
    %c0_i32_0 = arith.constant 0 : i32
    %c0_i32_1 = arith.constant 0 : i32
    return %c0_i32, %c0_i32_0 : i32, i32
  }
  func.func @transform_2(%arg0: i32, %arg1: i32) -> (i32, i32) {
    %c0_i32 = arith.constant 0 : i32
    %c0_i32_0 = arith.constant 0 : i32
    %c0_i32_1 = arith.constant 0 : i32
    return %c0_i32, %c0_i32_0 : i32, i32
  }
  func.func @transform_3(%arg0: i32, %arg1: i32) -> (i32, i32) {
    %c0_i32 = arith.constant 0 : i32
    %c0_i32_0 = arith.constant 0 : i32
    %c0_i32_1 = arith.constant 0 : i32
    return %c0_i32, %c0_i32_0 : i32, i32
  }
  func.func @transform_4(%arg0: i32, %arg1: i32) -> (i32, i32) {
    %c0_i32 = arith.constant 0 : i32
    %c0_i32_0 = arith.constant 0 : i32
    %c0_i32_1 = arith.constant 0 : i32
    return %c0_i32, %c0_i32_0 : i32, i32
  }
  func.func @transform_5(%arg0: i32, %arg1: i32) -> (i32, i32) {
    %c0_i32 = arith.constant 0 : i32
    %c0_i32_0 = arith.constant 0 : i32
    %c0_i32_1 = arith.constant 0 : i32
    return %c0_i32, %c0_i32_0 : i32, i32
  }
  func.func @transform_6(%arg0: i32, %arg1: i32) -> (i32, i32) {
    %c0_i32 = arith.constant 0 : i32
    %c0_i32_0 = arith.constant 0 : i32
    %c0_i32_1 = arith.constant 0 : i32
    return %c0_i32, %c0_i32_0 : i32, i32
  }
  func.func @transform_7(%arg0: i32, %arg1: i32) -> (i32, i32) {
    %c0_i32 = arith.constant 0 : i32
    %c0_i32_0 = arith.constant 0 : i32
    %c0_i32_1 = arith.constant 0 : i32
    return %c0_i32, %c0_i32_0 : i32, i32
  }
  func.func @transform_8(%arg0: i32, %arg1: i32) -> (i32, i32, i32) {
    %c0_i32 = arith.constant 0 : i32
    %c0_i32_0 = arith.constant 0 : i32
    return %arg0, %arg1, %c0_i32 : i32, i32, i32
  }
}

</mosaic_0001>

<llo_original>
// kernel: tpu_custom_call.1
$region0: #{tpu_custom_call.1}
  #allocation0 [shape = 'u32[]', space=smem, size = 0x4, offset = 0x4, fixed_abs, tag = 'smem constant byte address 0x4 - core index']
  #allocation1 [shape = 'u32[72,128]{1,0:T(1,128)}', space=vmem, size = 0x9000, scoped, tag = 'internal scratch']
  #allocation2 [shape = 'bf16[16,128]{1,0:T(8,128)(2,1)}', space=vmem, size = 0x1000, scoped, tag = 'scratch operand']
  #allocation3 [shape = 'bf16[16,64]{1,0:T(8,128)(2,1)}', space=vmem, size = 0x1000, scoped, tag = 'scratch operand']
  %s0 = inlined_call_operand.hbm [shape: f32[2,16,64], index: 0, kind: input, shape index: {}]
  %s1 = inlined_call_operand.hbm [shape: bf16[64,64], index: 1, kind: input, shape index: {}]
  %s2 = inlined_call_operand.vmem [shape: f32[1,64], index: 2, kind: input, shape index: {}]
  %s3 = inlined_call_operand.hbm [shape: bf16[64,128], index: 3, kind: input, shape index: {}]
  %s4 = inlined_call_operand.vmem [shape: f32[1,128], index: 4, kind: input, shape index: {}]
  %s5 = inlined_call_operand.hbm [shape: bf16[64,64], index: 5, kind: input, shape index: {}]
  %s6 = inlined_call_operand.vmem [shape: f32[1,64], index: 6, kind: input, shape index: {}]
  %s7 = inlined_call_operand.vmem [shape: f32[1,64], index: 7, kind: input, shape index: {}]
  %s8 = inlined_call_operand.hbm [shape: f32[2,16,64], index: 8, kind: output, shape index: {}]
  %s9 = sld [smem:[#allocation0]]
  $region85: #{tpu_custom_call.1} parent=0
    _
  %s11 = ssub.s32 1, %s9
  %s12 = scalar_select 0, %s11, %s9
  $region1: #{tpu_custom_call.1} parent=0
    #allocation4 [shape = 'u8[16384]{0}', space=vmem, size = 0x4000, scoped, tag = 'input window, operand 0']
    #allocation5 [shape = 's32[2]{0}', space=sflag, size = 0x8, scoped, tag = 'scoped memory for tpu_custom_call.1']
    #allocation6 [shape = 's32[2]{0}', space=sflag, size = 0x8, scoped, tag = 'scoped memory for tpu_custom_call.1']
    #allocation7 [shape = 'u8[16384]{0}', space=vmem, size = 0x4000, scoped, tag = 'input window, operand 1, single buffered']
    #allocation8 [shape = 's32[1]{0}', space=sflag, size = 0x4, scoped, tag = 'scoped memory for tpu_custom_call.1']
    #allocation9 [shape = 'u8[16384]{0}', space=vmem, size = 0x4000, scoped, tag = 'input window, operand 3, single buffered']
    #allocation10 [shape = 'u8[16384]{0}', space=vmem, size = 0x4000, scoped, tag = 'input window, operand 5, single buffered']
    #allocation11 [shape = 's32[1]{0}', space=sflag, size = 0x4, scoped, tag = 'scoped memory for tpu_custom_call.1']
    #allocation12 [shape = 'u8[16384]{0}', space=vmem, size = 0x4000, scoped, tag = 'output window, operand 0']
    %13 = vsyncpa [#allocation5], 0
    %s14 = scalar_lea.sflag [#allocation5], 1
    %15 = vsyncpa %s14, 0
    %16 = vsyncpa [#allocation8], 0
    %17 = vsyncpa [#allocation11], 0
    %18 = vsyncpa [#allocation6], 0
    %s19 = scalar_lea.sflag [#allocation6], 1
    %20 = vsyncpa %s19, 0
    loop: start=0, step=1, limit=4
    $region2: #{tpu_custom_call.1} parent=1 // loop_pre_header
      _
    $region3: #{tpu_custom_call.1} parent=1 // loop_header
      %s22 = sphi 0, %s26
      %p23 = scmp.ge.s32.totalorder %s22, 4
      %s29 = sphi 0, %s41
      %s30 = sphi 0, %s37
      %s31 = sphi 0, %s29
      %s32 = sphi 0, %s30
      %s33 = sphi 0, %s31
      %s34 = sphi 0, %s32
      %s44 = sphi 0, %s46
      %s47 = sphi 0, %s44
      %s48 = sphi 0, %s47
      %s64 = sphi 0, %s48
      %s68 = sphi 0, %s68
      %s70 = sphi 0, %s68
      %s71 = sphi 0, %s70
      %s85 = sphi 0, %s71
      %s89 = sphi 0, %s89
      %s91 = sphi 0, %s89
      %s92 = sphi 0, %s91
      %s106 = sphi 0, %s92
      %s110 = sphi 0, %s110
      %s112 = sphi 0, %s110
      %s113 = sphi 0, %s112
      %s127 = sphi 0, %s113
      %s131 = sphi 0, %s131
      %s133 = sphi 0, %s131
      %s134 = sphi 0, %s133
      %s148 = sphi 0, %s134
      %s152 = sphi 0, %s152
      %s154 = sphi 0, %s152
      %s155 = sphi 0, %s154
      %s169 = sphi 0, %s155
      %s173 = sphi 0, %s173
      %s175 = sphi 0, %s173
      %s176 = sphi 0, %s175
      %s190 = sphi 0, %s176
      %s194 = sphi 0, %s194
      %s196 = sphi 0, %s194
      %s197 = sphi 0, %s196
      %s211 = sphi 0, %s197
      %s219 = sphi 0, %s221
      %s222 = sphi 0, %s219
      %s223 = sphi 0, %s222
      %s239 = sphi 0, %s223
    $region4: #{tpu_custom_call.1} parent=1 // loop_header_branch
      %25 = sbr.rel (%p23) target = $region8
    $region5: #{tpu_custom_call.1} parent=1 // loop_body
      %s27 = ssub.s32 %s22, 1
      %s28 = ssub.s32 %s22, 2
      %s35 = sadd.s32 1, %s30
      %p36 = scmp.ge.s32.totalorder %s35, 1
      %s37 = scalar_select %p36, 0, %s35
      %s38 = sadd.s32 1, %s29
      %s39 = scalar_select %p36, %s38, %s29
      %p40 = scmp.ge.s32.totalorder %s39, 2
      %s41 = scalar_select %p40, 0, %s39
      %s42 = ssub.s32 %s29, %s41
      %p43 = scmp.eq.s32.totalorder %s42, 0
      %s45 = sadd.s32 %s44, 1
      %s46 = scalar_select %p43, %s44, %s45
      %p49 = pneg %p43
      %p50 = scmp.eq.s32.totalorder %s22, 1
      %p51 = por %p49, %p50
      %p52 = scmp.ne.s32.totalorder %s44, %s47
      %p53 = scmp.eq.s32.totalorder %s22, 0
      %p54 = por %p52, %p53
      %p55 = scmp.ne.s32.totalorder %s44, %s47
      %p56 = scmp.eq.s32.totalorder %s27, 1
      %p57 = por %p55, %p56
      %p58 = scmp.ne.s32.totalorder %s47, %s48
      %p59 = scmp.eq.s32.totalorder %s27, 0
      %p60 = por %p58, %p59
      %p61 = scmp.ne.s32.totalorder %s47, %s48
      %p62 = scmp.eq.s32.totalorder %s28, 1
      %p63 = por %p61, %p62
      %p65 = scmp.ne.s32.totalorder %s48, %s64
      %p66 = scmp.eq.s32.totalorder %s28, 0
      %p67 = por %p65, %p66
      %s69 = sadd.s32 %s68, 1
      %p72 = scmp.eq.s32.totalorder %s22, 1
      %p73 = scmp.ne.s32.totalorder %s68, %s70
      %p74 = scmp.eq.s32.totalorder %s22, 0
      %p75 = por %p73, %p74
      %p76 = scmp.ne.s32.totalorder %s68, %s70
      %p77 = scmp.eq.s32.totalorder %s27, 1
      %p78 = por %p76, %p77
      %p79 = scmp.ne.s32.totalorder %s70, %s71
      %p80 = scmp.eq.s32.totalorder %s27, 0
      %p81 = por %p79, %p80
      %p82 = scmp.ne.s32.totalorder %s70, %s71
      %p83 = scmp.eq.s32.totalorder %s28, 1
      %p84 = por %p82, %p83
      %p86 = scmp.ne.s32.totalorder %s71, %s85
      %p87 = scmp.eq.s32.totalorder %s28, 0
      %p88 = por %p86, %p87
      %s90 = sadd.s32 %s89, 1
      %p93 = scmp.eq.s32.totalorder %s22, 1
      %p94 = scmp.ne.s32.totalorder %s89, %s91
      %p95 = scmp.eq.s32.totalorder %s22, 0
      %p96 = por %p94, %p95
      %p97 = scmp.ne.s32.totalorder %s89, %s91
      %p98 = scmp.eq.s32.totalorder %s27, 1
      %p99 = por %p97, %p98
      %p100 = scmp.ne.s32.totalorder %s91, %s92
      %p101 = scmp.eq.s32.totalorder %s27, 0
      %p102 = por %p100, %p101
      %p103 = scmp.ne.s32.totalorder %s91, %s92
      %p104 = scmp.eq.s32.totalorder %s28, 1
      %p105 = por %p103, %p104
      %p107 = scmp.ne.s32.totalorder %s92, %s106
      %p108 = scmp.eq.s32.totalorder %s28, 0
      %p109 = por %p107, %p108
      %s111 = sadd.s32 %s110, 1
      %p114 = scmp.eq.s32.totalorder %s22, 1
      %p115 = scmp.ne.s32.totalorder %s110, %s112
      %p116 = scmp.eq.s32.totalorder %s22, 0
      %p117 = por %p115, %p116
      %p118 = scmp.ne.s32.totalorder %s110, %s112
      %p119 = scmp.eq.s32.totalorder %s27, 1
      %p120 = por %p118, %p119
      %p121 = scmp.ne.s32.totalorder %s112, %s113
      %p122 = scmp.eq.s32.totalorder %s27, 0
      %p123 = por %p121, %p122
      %p124 = scmp.ne.s32.totalorder %s112, %s113
      %p125 = scmp.eq.s32.totalorder %s28, 1
      %p126 = por %p124, %p125
      %p128 = scmp.ne.s32.totalorder %s113, %s127
      %p129 = scmp.eq.s32.totalorder %s28, 0
      %p130 = por %p128, %p129
      %s132 = sadd.s32 %s131, 1
      %p135 = scmp.eq.s32.totalorder %s22, 1
      %p136 = scmp.ne.s32.totalorder %s131, %s133
      %p137 = scmp.eq.s32.totalorder %s22, 0
      %p138 = por %p136, %p137
      %p139 = scmp.ne.s32.totalorder %s131, %s133
      %p140 = scmp.eq.s32.totalorder %s27, 1
      %p141 = por %p139, %p140
      %p142 = scmp.ne.s32.totalorder %s133, %s134
      %p143 = scmp.eq.s32.totalorder %s27, 0
      %p144 = por %p142, %p143
      %p145 = scmp.ne.s32.totalorder %s133, %s134
      %p146 = scmp.eq.s32.totalorder %s28, 1
      %p147 = por %p145, %p146
      %p149 = scmp.ne.s32.totalorder %s134, %s148
      %p150 = scmp.eq.s32.totalorder %s28, 0
      %p151 = por %p149, %p150
      %s153 = sadd.s32 %s152, 1
      %p156 = scmp.eq.s32.totalorder %s22, 1
      %p157 = scmp.ne.s32.totalorder %s152, %s154
      %p158 = scmp.eq.s32.totalorder %s22, 0
      %p159 = por %p157, %p158
      %p160 = scmp.ne.s32.totalorder %s152, %s154
      %p161 = scmp.eq.s32.totalorder %s27, 1
      %p162 = por %p160, %p161
      %p163 = scmp.ne.s32.totalorder %s154, %s155
      %p164 = scmp.eq.s32.totalorder %s27, 0
      %p165 = por %p163, %p164
      %p166 = scmp.ne.s32.totalorder %s154, %s155
      %p167 = scmp.eq.s32.totalorder %s28, 1
      %p168 = por %p166, %p167
      %p170 = scmp.ne.s32.totalorder %s155, %s169
      %p171 = scmp.eq.s32.totalorder %s28, 0
      %p172 = por %p170, %p171
      %s174 = sadd.s32 %s173, 1
      %p177 = scmp.eq.s32.totalorder %s22, 1
      %p178 = scmp.ne.s32.totalorder %s173, %s175
      %p179 = scmp.eq.s32.totalorder %s22, 0
      %p180 = por %p178, %p179
      %p181 = scmp.ne.s32.totalorder %s173, %s175
      %p182 = scmp.eq.s32.totalorder %s27, 1
      %p183 = por %p181, %p182
      %p184 = scmp.ne.s32.totalorder %s175, %s176
      %p185 = scmp.eq.s32.totalorder %s27, 0
      %p186 = por %p184, %p185
      %p187 = scmp.ne.s32.totalorder %s175, %s176
      %p188 = scmp.eq.s32.totalorder %s28, 1
      %p189 = por %p187, %p188
      %p191 = scmp.ne.s32.totalorder %s176, %s190
      %p192 = scmp.eq.s32.totalorder %s28, 0
      %p193 = por %p191, %p192
      %s195 = sadd.s32 %s194, 1
      %p198 = scmp.eq.s32.totalorder %s22, 1
      %p199 = scmp.ne.s32.totalorder %s194, %s196
      %p200 = scmp.eq.s32.totalorder %s22, 0
      %p201 = por %p199, %p200
      %p202 = scmp.ne.s32.totalorder %s194, %s196
      %p203 = scmp.eq.s32.totalorder %s27, 1
      %p204 = por %p202, %p203
      %p205 = scmp.ne.s32.totalorder %s196, %s197
      %p206 = scmp.eq.s32.totalorder %s27, 0
      %p207 = por %p205, %p206
      %p208 = scmp.ne.s32.totalorder %s196, %s197
      %p209 = scmp.eq.s32.totalorder %s28, 1
      %p210 = por %p208, %p209
      %p212 = scmp.ne.s32.totalorder %s197, %s211
      %p213 = scmp.eq.s32.totalorder %s28, 0
      %p214 = por %p212, %p213
      %s215 = ssub.s32 %s29, %s41
      %s216 = ssub.s32 %s30, %s37
      %s217 = sor.u32 %s215, %s216
      %p218 = scmp.eq.s32.totalorder %s217, 0
      %s220 = sadd.s32 %s219, 1
      %s221 = scalar_select %p218, %s219, %s220
      %p224 = pneg %p218
      %p225 = scmp.eq.s32.totalorder %s22, 1
      %p226 = por %p224, %p225
      %p227 = scmp.ne.s32.totalorder %s219, %s222
      %p228 = scmp.eq.s32.totalorder %s22, 0
      %p229 = por %p227, %p228
      %p230 = scmp.ne.s32.totalorder %s219, %s222
      %p231 = scmp.eq.s32.totalorder %s27, 1
      %p232 = por %p230, %p231
      %p233 = scmp.ne.s32.totalorder %s222, %s223
      %p234 = scmp.eq.s32.totalorder %s27, 0
      %p235 = por %p233, %p234
      %p236 = scmp.ne.s32.totalorder %s222, %s223
      %p237 = scmp.eq.s32.totalorder %s28, 1
      %p238 = por %p236, %p237
      %p240 = scmp.ne.s32.totalorder %s223, %s239
      %p241 = scmp.eq.s32.totalorder %s28, 0
      %p242 = por %p240, %p241
      %p243 = scmp.le.s32.totalorder 1, %s22
      %p244 = scmp.lt.s32.totalorder %s22, 3
      %p245 = pnand %p243, %p244
      %p246 = pneg %p245
      // Predicated region
      $region9: #{tpu_custom_call.1} parent=5 // pred_check
        _
      $region10: #{tpu_custom_call.1} parent=5 // pred_check_branch
        %248 = sbr.rel (%p245) target = $region12
      $region11: #{tpu_custom_call.1} parent=5 // pred_region
        %s249 = ssub.s32 %s22, 1
        // Predicated region
        $region13: #{tpu_custom_call.1} parent=11 // pred_check
          %p250 = pneg %p81
        $region14: #{tpu_custom_call.1} parent=11 // pred_check_branch
          %252 = sbr.rel (%p250) target = $region16
        $region15: #{tpu_custom_call.1} parent=11 // pred_region
          %254 = vsyncadd [#allocation8], 0
          %s255 = sshll.u32 %s1, 4
          %s256 = int_to_ptr.hbm [resolvable:$true] %s255
          %s257 = sshll.u32 [#allocation7], 4
          %s258 = int_to_ptr.vmem [resolvable:$true] %s257
          %263 = dma.hbm_to_vmem [thread:$0]  %s256, 512, %s258, [#allocation8], 64, 64, 4
        $region16: #{tpu_custom_call.1} parent=11 // pred_fallthru
          _
        // Predicated region
        $region17: #{tpu_custom_call.1} parent=11 // pred_check
          %p264 = pneg %p102
        $region18: #{tpu_custom_call.1} parent=11 // pred_check_branch
          %266 = sbr.rel (%p264) target = $region20
        $region19: #{tpu_custom_call.1} parent=11 // pred_region
          _
        $region20: #{tpu_custom_call.1} parent=11 // pred_fallthru
          _
        // Predicated region
        $region21: #{tpu_custom_call.1} parent=11 // pred_check
          %p267 = pneg %p123
        $region22: #{tpu_custom_call.1} parent=11 // pred_check_branch
          %269 = sbr.rel (%p267) target = $region24
        $region23: #{tpu_custom_call.1} parent=11 // pred_region
          %271 = vsyncadd [#allocation8], 0
          %s272 = sshll.u32 %s3, 4
          %s273 = int_to_ptr.hbm [resolvable:$true] %s272
          %s274 = sshll.u32 [#allocation9], 4
          %s275 = int_to_ptr.vmem [resolvable:$true] %s274
          %280 = dma.hbm_to_vmem [thread:$0]  %s273, 512, %s275, [#allocation8], 64, 64, 4
        $region24: #{tpu_custom_call.1} parent=11 // pred_fallthru
          _
        // Predicated region
        $region25: #{tpu_custom_call.1} parent=11 // pred_check
          %p281 = pneg %p144
        $region26: #{tpu_custom_call.1} parent=11 // pred_check_branch
          %283 = sbr.rel (%p281) target = $region28
        $region27: #{tpu_custom_call.1} parent=11 // pred_region
          _
        $region28: #{tpu_custom_call.1} parent=11 // pred_fallthru
          _
        // Predicated region
        $region29: #{tpu_custom_call.1} parent=11 // pred_check
          %p284 = pneg %p165
        $region30: #{tpu_custom_call.1} parent=11 // pred_check_branch
          %286 = sbr.rel (%p284) target = $region32
        $region31: #{tpu_custom_call.1} parent=11 // pred_region
          %288 = vsyncadd [#allocation11], 0
          %s289 = sshll.u32 %s5, 4
          %s290 = int_to_ptr.hbm [resolvable:$true] %s289
          %s291 = sshll.u32 [#allocation10], 4
          %s292 = int_to_ptr.vmem [resolvable:$true] %s291
          %297 = dma.hbm_to_vmem [thread:$0]  %s290, 512, %s292, [#allocation11], 64, 64, 4
        $region32: #{tpu_custom_call.1} parent=11 // pred_fallthru
          _
        // Predicated region
        $region33: #{tpu_custom_call.1} parent=11 // pred_check
          %p298 = pneg %p186
        $region34: #{tpu_custom_call.1} parent=11 // pred_check_branch
          %300 = sbr.rel (%p298) target = $region36
        $region35: #{tpu_custom_call.1} parent=11 // pred_region
          _
        $region36: #{tpu_custom_call.1} parent=11 // pred_fallthru
          _
        // Predicated region
        $region37: #{tpu_custom_call.1} parent=11 // pred_check
          %p301 = pneg %p207
        $region38: #{tpu_custom_call.1} parent=11 // pred_check_branch
          %303 = sbr.rel (%p301) target = $region40
        $region39: #{tpu_custom_call.1} parent=11 // pred_region
          _
        $region40: #{tpu_custom_call.1} parent=11 // pred_fallthru
          _
      $region12: #{tpu_custom_call.1} parent=5 // pred_fallthru
        _
      %p304 = scmp.lt.s32.totalorder %s22, 2
      // Predicated region
      $region41: #{tpu_custom_call.1} parent=5 // pred_check
        %p305 = pneg %p304
      $region42: #{tpu_custom_call.1} parent=5 // pred_check_branch
        %307 = sbr.rel (%p305) target = $region44
      $region43: #{tpu_custom_call.1} parent=5 // pred_region
        // Predicated region
        $region45: #{tpu_custom_call.1} parent=43 // pred_check
          %p308 = pneg %p54
        $region46: #{tpu_custom_call.1} parent=43 // pred_check_branch
          %310 = sbr.rel (%p308) target = $region48
        $region47: #{tpu_custom_call.1} parent=43 // pred_region
          %s311 = sand.u32 %s44, 1
          %s312 = scalar_lea.sflag [#allocation5], %s311
          %s313 = sand.u32 %s44, 1
          %s314 = smul.addr %s313, 16
          %s315 = scalar_lea.vmem [#allocation4], %s314
          %317 = vsyncadd %s312, 0
          %s318 = smul.addr %s29, 2
          %s319 = smul.addr %s318, 8
          %s320 = scalar_lea.hbm %s0, %s319
          %s321 = sshll.u32 %s320, 4
          %s322 = int_to_ptr.hbm [resolvable:$true] %s321
          %s323 = sshll.u32 %s315, 4
          %s324 = int_to_ptr.vmem [resolvable:$true] %s323
          %329 = dma.hbm_to_vmem [thread:$0]  %s322, 256, %s324, %s312, 128, 128, 8
        $region48: #{tpu_custom_call.1} parent=43 // pred_fallthru
          _
      $region44: #{tpu_custom_call.1} parent=5 // pred_fallthru
        _
      %p330 = scmp.le.s32.totalorder 1, %s22
      %p331 = scmp.lt.s32.totalorder %s22, 3
      %p332 = pnand %p330, %p331
      %p333 = pneg %p332
      // Predicated region
      $region49: #{tpu_custom_call.1} parent=5 // pred_check
        _
      $region50: #{tpu_custom_call.1} parent=5 // pred_check_branch
        %335 = sbr.rel (%p332) target = $region52
      $region51: #{tpu_custom_call.1} parent=5 // pred_region
        %s336 = ssub.s32 %s22, 1
        %s337 = sand.u32 %s47, 1
        %s338 = scalar_lea.sflag [#allocation5], %s337
        %s339 = sand.u32 %s47, 1
        %s340 = smul.addr %s339, 16
        %s341 = scalar_lea.vmem [#allocation4], %s340
        // Predicated region
        $region53: #{tpu_custom_call.1} parent=51 // pred_check
          %p342 = pneg %p60
        $region54: #{tpu_custom_call.1} parent=51 // pred_check_branch
          %344 = sbr.rel (%p342) target = $region56
        $region55: #{tpu_custom_call.1} parent=51 // pred_region
          %346 = dma.done %s338, 256
        $region56: #{tpu_custom_call.1} parent=51 // pred_fallthru
          _
        // Predicated region
        $region57: #{tpu_custom_call.1} parent=51 // pred_check
          %p347 = pneg %p81
        $region58: #{tpu_custom_call.1} parent=51 // pred_check_branch
          %349 = sbr.rel (%p347) target = $region60
        $region59: #{tpu_custom_call.1} parent=51 // pred_region
          %351 = dma.done [#allocation8], 512
        $region60: #{tpu_custom_call.1} parent=51 // pred_fallthru
          _
        // Predicated region
        $region61: #{tpu_custom_call.1} parent=51 // pred_check
          %p352 = pneg %p123
        $region62: #{tpu_custom_call.1} parent=51 // pred_check_branch
          %354 = sbr.rel (%p352) target = $region64
        $region63: #{tpu_custom_call.1} parent=51 // pred_region
          %356 = dma.done [#allocation8], 512
        $region64: #{tpu_custom_call.1} parent=51 // pred_fallthru
          _
        // Predicated region
        $region65: #{tpu_custom_call.1} parent=51 // pred_check
          %p357 = pneg %p165
        $region66: #{tpu_custom_call.1} parent=51 // pred_check_branch
          %359 = sbr.rel (%p357) target = $region68
        $region67: #{tpu_custom_call.1} parent=51 // pred_region
          %361 = dma.done [#allocation11], 512
        $region68: #{tpu_custom_call.1} parent=51 // pred_fallthru
          _
        %s362 = sand.u32 %s47, 1
        %s363 = scalar_lea.sflag [#allocation5], %s362
        %s364 = sand.u32 %s47, 1
        %s365 = smul.addr %s364, 16
        %s366 = scalar_lea.vmem [#allocation4], %s365
        %p367 = pneg %p60
        %p368 = pneg %p57
        %p369 = pneg %p81
        %p370 = pneg %p78
        %p371 = pneg %p102
        %p372 = pneg %p99
        %p373 = pneg %p123
        %p374 = pneg %p120
        %p375 = pneg %p144
        %p376 = pneg %p141
        %p377 = pneg %p165
        %p378 = pneg %p162
        %p379 = pneg %p186
        %p380 = pneg %p183
        %p381 = pneg %p207
        %p382 = pneg %p204
        %p383 = pneg %p235
        %p384 = pneg %p232
        %s385 = sand.u32 %s222, 1
        %s386 = scalar_lea.sflag [#allocation6], %s385
        %s387 = sand.u32 %s222, 1
        %s388 = smul.addr %s387, 16
        %s389 = scalar_lea.vmem [#allocation12], %s388
        %s390 = smul.u32 2, %s32
        %p392 = scmp.eq.s32.totalorder %s32, 0
        // Predicated region
        $region69: #{tpu_custom_call.1} parent=51 // pred_check
          %p393 = pneg %p392
        $region70: #{tpu_custom_call.1} parent=51 // pred_check_branch
          %395 = sbr.rel (%p393) target = $region72
        $region71: #{tpu_custom_call.1} parent=51 // pred_region
          %v396 = vld [vmem:[%s341] sm:$0xff]
          %v397 = vld [vmem:[%s341 + $0x8] sm:$0xff]
          %v398 = vpack.c.bf16 %v397, %v396
          %v399 = vld [vmem:[#allocation9] sm:$0xf]
          %v400 = vld [vmem:[#allocation9 + $0x4] sm:$0xf]
          %v401 = vld [vmem:[#allocation9 + $0x8] sm:$0xf]
          %v402 = vld [vmem:[#allocation9 + $0xc] sm:$0xf]
          %v403 = vld [vmem:[#allocation9 + $0x10] sm:$0xf]
          %v404 = vld [vmem:[#allocation9 + $0x14] sm:$0xf]
          %v405 = vld [vmem:[#allocation9 + $0x18] sm:$0xf]
          %v406 = vld [vmem:[#allocation9 + $0x1c] sm:$0xf]
          %v407 = vld [vmem:[%s4] sm:$0x1]
          %v409 = vperm.slane %v407, 0
          %v419 = vunpack.c.l.b16 %v399
          %v420 = vunpack.c.l.b16 %v400
          %v421 = vunpack.c.l.b16 %v401
          %v422 = vunpack.c.l.b16 %v402
          %v423 = vunpack.c.l.b16 %v403
          %v424 = vunpack.c.l.b16 %v404
          %v425 = vunpack.c.l.b16 %v405
          %v426 = vunpack.c.l.b16 %v406
          %v427 = vpack.c.b16 %v420, %v419
          %v428 = vpack.c.b16 %v422, %v421
          %v429 = vpack.c.b16 %v424, %v423
          %v430 = vpack.c.b16 %v426, %v425
          %vm435 = vcmask 523264
          %v437 = vsel %vm435, %v398, 0
          %439 = vmatpush.bf16.msra.mxu0 0
          %440 = vmatpush.bf16.msra.mxu0 0
          %441 = vmatpush.bf16.msra.mxu0 0
          %442 = vmatpush.bf16.msra.mxu0 0
          %443 = vmatpush.bf16.msra.mxu0 %v430
          %444 = vmatpush.bf16.msra.mxu0 %v429
          %445 = vmatpush.bf16.msra.mxu0 %v428
          %446 = vmatpush.bf16.msra.mxu0 %v427
          %447 = vmatmul.bf16.gmra.mxu0 %v437
          %v448 = vpop.f32.mrf.mxu0
          %v449 = vadd.f32 %v409, %v448
          %v450 = vpop.f32.mrf.mxu0
          %v451 = vadd.f32 %v409, %v450
          %452 = vdwg.mxu0
          %v453 = vpack.c.bf16 %v449, %v449
          %v454 = vpack.c.bf16 %v451, %v451
          %455 = vst [vmem:[#allocation2] sm:$0xf] %v453
          %456 = vst [vmem:[#allocation2 + $0x4] sm:$0xf] %v454
        $region72: #{tpu_custom_call.1} parent=51 // pred_fallthru
          _
        %s457 = smul.u32 %s32, 16
        %s458 = scalar_lea.vmem %s341, %s457 [#allocation4]
        %v459 = vld [vmem:[%s458] sm:$0xff]
        %v460 = vld [vmem:[%s458 + $0x8] sm:$0xff]
        %v461 = vpack.c.bf16 %v460, %v459
        %v462 = vld [vmem:[#allocation7] sm:$0xf]
        %v463 = vld [vmem:[#allocation7 + $0x4] sm:$0xf]
        %v464 = vld [vmem:[#allocation7 + $0x8] sm:$0xf]
        %v465 = vld [vmem:[#allocation7 + $0xc] sm:$0xf]
        %v466 = vld [vmem:[#allocation7 + $0x10] sm:$0xf]
        %v467 = vld [vmem:[#allocation7 + $0x14] sm:$0xf]
        %v468 = vld [vmem:[#allocation7 + $0x18] sm:$0xf]
        %v469 = vld [vmem:[#allocation7 + $0x1c] sm:$0xf]
        %v470 = vld [vmem:[%s2] sm:$0x1]
        %v472 = vperm.slane %v470, 0
        %v482 = vunpack.c.l.b16 %v462
        %v483 = vunpack.c.l.b16 %v463
        %v484 = vunpack.c.l.b16 %v464
        %v485 = vunpack.c.l.b16 %v465
        %v486 = vunpack.c.l.b16 %v466
        %v487 = vunpack.c.l.b16 %v467
        %v488 = vunpack.c.l.b16 %v468
        %v489 = vunpack.c.l.b16 %v469
        %v490 = vpack.c.b16 %v483, %v482
        %v491 = vpack.c.b16 %v485, %v484
        %v492 = vpack.c.b16 %v487, %v486
        %v493 = vpack.c.b16 %v489, %v488
        %vm498 = vcmask 523264
        %v500 = vsel %vm498, %v461, 0
        %502 = vmatpush.bf16.msra.mxu0 0
        %503 = vmatpush.bf16.msra.mxu0 0
        %504 = vmatpush.bf16.msra.mxu0 0
        %505 = vmatpush.bf16.msra.mxu0 0
        %506 = vmatpush.bf16.msra.mxu0 %v493
        %507 = vmatpush.bf16.msra.mxu0 %v492
        %508 = vmatpush.bf16.msra.mxu0 %v491
        %509 = vmatpush.bf16.msra.mxu0 %v490
        %510 = vmatmul.bf16.gmra.mxu0 %v500
        %v511 = vpop.f32.mrf.mxu0
        %v512 = vadd.f32 %v472, %v511
        %v513 = vpop.f32.mrf.mxu0
        %v514 = vadd.f32 %v472, %v513
        %515 = vdwg.mxu0
        %v516 = vpack.c.bf16 %v512, %v512
        %v517 = vpack.c.bf16 %v514, %v514
        %v518 = vld [vmem:[#allocation2] sm:$0xf]
        %v519 = vld [vmem:[#allocation2 + $0x4] sm:$0xf]
        %v522 = vunpack.c.l.b16 %v516
        %v523 = vunpack.c.l.b16 %v517
        %v524 = vpack.c.b16 %v523, %v522
        %v527 = vunpack.c.l.b16 %v518
        %v528 = vunpack.c.l.b16 %v519
        %v529 = vpack.c.b16 %v528, %v527
        %vm530 = vcmask 130048
        %v532 = vsel %vm530, %v524, 0
        %v535 = vsel %vm530, %v529, 0
        %537 = vmatpush.bf16.xpose.msra.mxu0 0
        %538 = vmatpush.bf16.xpose.msra.mxu0 0
        %539 = vmatpush.bf16.xpose.msra.mxu0 0
        %540 = vmatpush.bf16.xpose.msra.mxu0 0
        %541 = vmatpush.bf16.xpose.msra.mxu0 0
        %542 = vmatpush.bf16.xpose.msra.mxu0 0
        %543 = vmatpush.bf16.xpose.msra.mxu0 0
        %544 = vmatpush.bf16.xpose.msra.mxu0 %v535
        %545 = vmatmul.bf16.gmra.mxu0 %v532
        %v546 = vpop.f32.mrf.mxu0
        %v547 = vadd.f32 0.0, %v546
        %v548 = vpop.f32.mrf.mxu0
        %v549 = vadd.f32 0.0, %v548
        %550 = vdwg.mxu0
        %v551 = vsel %vm530, %v547, -inf
        %552 = vmax.xlane.f32.xlu0 %v551
        %v553 = vpop.xlane.xlu0 %552
        %v554 = vsel %vm530, %v549, -inf
        %555 = vmax.xlane.f32.xlu0 %v554
        %v556 = vpop.xlane.xlu0 %555
        %v557 = vsub.f32 %v547, %v553
        %v558 = vsub.f32 %v549, %v556
        %v559 = vpack.c.bf16 %v558, %v557
        %v560 = vunpack.c.l.bf16 %v559
        %v561 = vunpack.c.h.bf16 %v559
        %v562 = vmul.f32 %v560, 1.442695
        %v563 = vpow.pop %v562
        %v564 = vmul.f32 %v561, 1.442695
        %v565 = vpow.pop %v564
        %v566 = vpack.c.bf16 %v565, %v563
        %v567 = vunpack.c.l.bf16 %v566
        %v568 = vunpack.c.h.bf16 %v566
        %v569 = vsel %vm530, %v567, 0.0
        %570 = vadd.xlane.f32.xlu0 %v569
        %v571 = vpop.xlane.xlu0 %570
        %v572 = vsel %vm530, %v568, 0.0
        %573 = vadd.xlane.f32.xlu0 %v572
        %v574 = vpop.xlane.xlu0 %573
        %575 = vrot.lane.b32.xlu0 %v529, 64
        %v576 = vpop.permute.xlu0 %575
        %v579 = vsel %vm530, %v566, 0
        %581 = vmatpush.bf16.msra.mxu0 0
        %582 = vmatpush.bf16.msra.mxu0 0
        %583 = vmatpush.bf16.msra.mxu0 0
        %584 = vmatpush.bf16.msra.mxu0 0
        %585 = vmatpush.bf16.msra.mxu0 0
        %586 = vmatpush.bf16.msra.mxu0 0
        %587 = vmatpush.bf16.msra.mxu0 0
        %588 = vmatpush.bf16.msra.mxu0 %v576
        %589 = vmatmul.bf16.gmra.mxu0 %v579
        %v590 = vpop.f32.mrf.mxu0
        %v591 = vadd.f32 0.0, %v590
        %v592 = vpop.f32.mrf.mxu0
        %v593 = vadd.f32 0.0, %v592
        %594 = vdwg.mxu0
        %v595 = vrcp.pop %v571
        %v596 = vrcp.pop %v574
        %v597 = vmul.f32 %v591, %v595
        %v598 = vmul.f32 %v593, %v596
        %v599 = vpack.c.bf16 %v597, %v597
        %v600 = vpack.c.bf16 %v598, %v598
        %vm601 = vcmask 125952
        %602 = vst.msk [vmem:[#allocation3] sm:$0xf] %vm601, %v599
        %603 = vst.msk [vmem:[#allocation3 + $0x4] sm:$0xf] %vm601, %v600
        %v604 = vld [vmem:[#allocation2] sm:$0xf]
        %v605 = vld [vmem:[#allocation2 + $0x4] sm:$0xf]
        %606 = vrot.lane.b32.xlu0 %v524, 112
        %v607 = vpop.permute.xlu0 %606
        %v610 = vunpack.c.l.b16 %v604
        %v611 = vunpack.c.l.b16 %v605
        %v612 = vpack.c.b16 %v611, %v610
        %613 = vrot.lane.b32.xlu0 %v612, 112
        %v614 = vpop.permute.xlu0 %613
        %v616 = vsel %vm530, %v607, 0
        %v619 = vsel %vm530, %v614, 0
        %621 = vmatpush.bf16.xpose.msra.mxu0 0
        %622 = vmatpush.bf16.xpose.msra.mxu0 0
        %623 = vmatpush.bf16.xpose.msra.mxu0 0
        %624 = vmatpush.bf16.xpose.msra.mxu0 0
        %625 = vmatpush.bf16.xpose.msra.mxu0 0
        %626 = vmatpush.bf16.xpose.msra.mxu0 0
        %627 = vmatpush.bf16.xpose.msra.mxu0 0
        %628 = vmatpush.bf16.xpose.msra.mxu0 %v619
        %629 = vmatmul.bf16.gmra.mxu0 %v616
        %v630 = vpop.f32.mrf.mxu0
        %v631 = vadd.f32 0.0, %v630
        %v632 = vpop.f32.mrf.mxu0
        %v633 = vadd.f32 0.0, %v632
        %634 = vdwg.mxu0
        %v635 = vsel %vm530, %v631, -inf
        %636 = vmax.xlane.f32.xlu0 %v635
        %v637 = vpop.xlane.xlu0 %636
        %v638 = vsel %vm530, %v633, -inf
        %639 = vmax.xlane.f32.xlu0 %v638
        %v640 = vpop.xlane.xlu0 %639
        %v641 = vsub.f32 %v631, %v637
        %v642 = vsub.f32 %v633, %v640
        %v643 = vpack.c.bf16 %v642, %v641
        %v644 = vunpack.c.l.bf16 %v643
        %v645 = vunpack.c.h.bf16 %v643
        %v646 = vmul.f32 %v644, 1.442695
        %v647 = vpow.pop %v646
        %v648 = vmul.f32 %v645, 1.442695
        %v649 = vpow.pop %v648
        %v650 = vpack.c.bf16 %v649, %v647
        %v651 = vunpack.c.l.bf16 %v650
        %v652 = vunpack.c.h.bf16 %v650
        %v653 = vsel %vm530, %v651, 0.0
        %654 = vadd.xlane.f32.xlu0 %v653
        %v655 = vpop.xlane.xlu0 %654
        %v656 = vsel %vm530, %v652, 0.0
        %657 = vadd.xlane.f32.xlu0 %v656
        %v658 = vpop.xlane.xlu0 %657
        %659 = vrot.lane.b32.xlu0 %v612, 48
        %v660 = vpop.permute.xlu0 %659
        %v663 = vsel %vm530, %v650, 0
        %665 = vmatpush.bf16.msra.mxu0 0
        %666 = vmatpush.bf16.msra.mxu0 0
        %667 = vmatpush.bf16.msra.mxu0 0
        %668 = vmatpush.bf16.msra.mxu0 0
        %669 = vmatpush.bf16.msra.mxu0 0
        %670 = vmatpush.bf16.msra.mxu0 0
        %671 = vmatpush.bf16.msra.mxu0 0
        %672 = vmatpush.bf16.msra.mxu0 %v660
        %673 = vmatmul.bf16.gmra.mxu0 %v663
        %v674 = vpop.f32.mrf.mxu0
        %v675 = vadd.f32 0.0, %v674
        %v676 = vpop.f32.mrf.mxu0
        %v677 = vadd.f32 0.0, %v676
        %678 = vdwg.mxu0
        %v679 = vrcp.pop %v655
        %v680 = vrcp.pop %v658
        %v681 = vmul.f32 %v675, %v679
        %v682 = vmul.f32 %v677, %v680
        %v683 = vpack.c.bf16 %v681, %v681
        %v684 = vpack.c.bf16 %v682, %v682
        %687 = vrot.lane.b32.xlu0 %v683, 16
        %v688 = vpop.permute.xlu0 %687
        %689 = vrot.lane.b32.xlu0 %v684, 16
        %v690 = vpop.permute.xlu0 %689
        %vm693 = vcmask 257152
        %694 = vst.msk [vmem:[#allocation3] sm:$0xf] %vm693, %v688
        %695 = vst.msk [vmem:[#allocation3 + $0x4] sm:$0xf] %vm693, %v690
        %v696 = vld [vmem:[#allocation2] sm:$0xf]
        %v697 = vld [vmem:[#allocation2 + $0x4] sm:$0xf]
        %698 = vrot.lane.b32.xlu0 %v524, 96
        %v699 = vpop.permute.xlu0 %698
        %v702 = vunpack.c.l.b16 %v696
        %v703 = vunpack.c.l.b16 %v697
        %v704 = vpack.c.b16 %v703, %v702
        %705 = vrot.lane.b32.xlu0 %v704, 96
        %v706 = vpop.permute.xlu0 %705
        %v708 = vsel %vm530, %v699, 0
        %v711 = vsel %vm530, %v706, 0
        %713 = vmatpush.bf16.xpose.msra.mxu0 0
        %714 = vmatpush.bf16.xpose.msra.mxu0 0
        %715 = vmatpush.bf16.xpose.msra.mxu0 0
        %716 = vmatpush.bf16.xpose.msra.mxu0 0
        %717 = vmatpush.bf16.xpose.msra.mxu0 0
        %718 = vmatpush.bf16.xpose.msra.mxu0 0
        %719 = vmatpush.bf16.xpose.msra.mxu0 0
        %720 = vmatpush.bf16.xpose.msra.mxu0 %v711
        %721 = vmatmul.bf16.gmra.mxu0 %v708
        %v722 = vpop.f32.mrf.mxu0
        %v723 = vadd.f32 0.0, %v722
        %v724 = vpop.f32.mrf.mxu0
        %v725 = vadd.f32 0.0, %v724
        %726 = vdwg.mxu0
        %v727 = vsel %vm530, %v723, -inf
        %728 = vmax.xlane.f32.xlu0 %v727
        %v729 = vpop.xlane.xlu0 %728
        %v730 = vsel %vm530, %v725, -inf
        %731 = vmax.xlane.f32.xlu0 %v730
        %v732 = vpop.xlane.xlu0 %731
        %v733 = vsub.f32 %v723, %v729
        %v734 = vsub.f32 %v725, %v732
        %v735 = vpack.c.bf16 %v734, %v733
        %v736 = vunpack.c.l.bf16 %v735
        %v737 = vunpack.c.h.bf16 %v735
        %v738 = vmul.f32 %v736, 1.442695
        %v739 = vpow.pop %v738
        %v740 = vmul.f32 %v737, 1.442695
        %v741 = vpow.pop %v740
        %v742 = vpack.c.bf16 %v741, %v739
        %v743 = vunpack.c.l.bf16 %v742
        %v744 = vunpack.c.h.bf16 %v742
        %v745 = vsel %vm530, %v743, 0.0
        %746 = vadd.xlane.f32.xlu0 %v745
        %v747 = vpop.xlane.xlu0 %746
        %v748 = vsel %vm530, %v744, 0.0
        %749 = vadd.xlane.f32.xlu0 %v748
        %v750 = vpop.xlane.xlu0 %749
        %751 = vrot.lane.b32.xlu0 %v704, 32
        %v752 = vpop.permute.xlu0 %751
        %v755 = vsel %vm530, %v742, 0
        %757 = vmatpush.bf16.msra.mxu0 0
        %758 = vmatpush.bf16.msra.mxu0 0
        %759 = vmatpush.bf16.msra.mxu0 0
        %760 = vmatpush.bf16.msra.mxu0 0
        %761 = vmatpush.bf16.msra.mxu0 0
        %762 = vmatpush.bf16.msra.mxu0 0
        %763 = vmatpush.bf16.msra.mxu0 0
        %764 = vmatpush.bf16.msra.mxu0 %v752
        %765 = vmatmul.bf16.gmra.mxu0 %v755
        %v766 = vpop.f32.mrf.mxu0
        %v767 = vadd.f32 0.0, %v766
        %v768 = vpop.f32.mrf.mxu0
        %v769 = vadd.f32 0.0, %v768
        %770 = vdwg.mxu0
        %v771 = vrcp.pop %v747
        %v772 = vrcp.pop %v750
        %v773 = vmul.f32 %v767, %v771
        %v774 = vmul.f32 %v769, %v772
        %v775 = vpack.c.bf16 %v773, %v773
        %v776 = vpack.c.bf16 %v774, %v774
        %779 = vrot.lane.b32.xlu0 %v775, 32
        %v780 = vpop.permute.xlu0 %779
        %781 = vrot.lane.b32.xlu0 %v776, 32
        %v782 = vpop.permute.xlu0 %781
        %vm785 = vcmask 388352
        %786 = vst.msk [vmem:[#allocation3] sm:$0xf] %vm785, %v780
        %787 = vst.msk [vmem:[#allocation3 + $0x4] sm:$0xf] %vm785, %v782
        %v788 = vld [vmem:[#allocation2] sm:$0xf]
        %v789 = vld [vmem:[#allocation2 + $0x4] sm:$0xf]
        %790 = vrot.lane.b32.xlu0 %v524, 80
        %v791 = vpop.permute.xlu0 %790
        %v794 = vunpack.c.l.b16 %v788
        %v795 = vunpack.c.l.b16 %v789
        %v796 = vpack.c.b16 %v795, %v794
        %797 = vrot.lane.b32.xlu0 %v796, 80
        %v798 = vpop.permute.xlu0 %797
        %v800 = vsel %vm530, %v791, 0
        %v803 = vsel %vm530, %v798, 0
        %805 = vmatpush.bf16.xpose.msra.mxu0 0
        %806 = vmatpush.bf16.xpose.msra.mxu0 0
        %807 = vmatpush.bf16.xpose.msra.mxu0 0
        %808 = vmatpush.bf16.xpose.msra.mxu0 0
        %809 = vmatpush.bf16.xpose.msra.mxu0 0
        %810 = vmatpush.bf16.xpose.msra.mxu0 0
        %811 = vmatpush.bf16.xpose.msra.mxu0 0
        %812 = vmatpush.bf16.xpose.msra.mxu0 %v803
        %813 = vmatmul.bf16.gmra.mxu0 %v800
        %v814 = vpop.f32.mrf.mxu0
        %v815 = vadd.f32 0.0, %v814
        %v816 = vpop.f32.mrf.mxu0
        %v817 = vadd.f32 0.0, %v816
        %818 = vdwg.mxu0
        %v819 = vsel %vm530, %v815, -inf
        %820 = vmax.xlane.f32.xlu0 %v819
        %v821 = vpop.xlane.xlu0 %820
        %v822 = vsel %vm530, %v817, -inf
        %823 = vmax.xlane.f32.xlu0 %v822
        %v824 = vpop.xlane.xlu0 %823
        %v825 = vsub.f32 %v815, %v821
        %v826 = vsub.f32 %v817, %v824
        %v827 = vpack.c.bf16 %v826, %v825
        %v828 = vunpack.c.l.bf16 %v827
        %v829 = vunpack.c.h.bf16 %v827
        %v830 = vmul.f32 %v828, 1.442695
        %v831 = vpow.pop %v830
        %v832 = vmul.f32 %v829, 1.442695
        %v833 = vpow.pop %v832
        %v834 = vpack.c.bf16 %v833, %v831
        %v835 = vunpack.c.l.bf16 %v834
        %v836 = vunpack.c.h.bf16 %v834
        %v837 = vsel %vm530, %v835, 0.0
        %838 = vadd.xlane.f32.xlu0 %v837
        %v839 = vpop.xlane.xlu0 %838
        %v840 = vsel %vm530, %v836, 0.0
        %841 = vadd.xlane.f32.xlu0 %v840
        %v842 = vpop.xlane.xlu0 %841
        %843 = vrot.lane.b32.xlu0 %v796, 16
        %v844 = vpop.permute.xlu0 %843
        %v847 = vsel %vm530, %v834, 0
        %849 = vmatpush.bf16.msra.mxu0 0
        %850 = vmatpush.bf16.msra.mxu0 0
        %851 = vmatpush.bf16.msra.mxu0 0
        %852 = vmatpush.bf16.msra.mxu0 0
        %853 = vmatpush.bf16.msra.mxu0 0
        %854 = vmatpush.bf16.msra.mxu0 0
        %855 = vmatpush.bf16.msra.mxu0 0
        %856 = vmatpush.bf16.msra.mxu0 %v844
        %857 = vmatmul.bf16.gmra.mxu0 %v847
        %v858 = vpop.f32.mrf.mxu0
        %v859 = vadd.f32 0.0, %v858
        %v860 = vpop.f32.mrf.mxu0
        %v861 = vadd.f32 0.0, %v860
        %862 = vdwg.mxu0
        %v863 = vrcp.pop %v839
        %v864 = vrcp.pop %v842
        %v865 = vmul.f32 %v859, %v863
        %v866 = vmul.f32 %v861, %v864
        %v867 = vpack.c.bf16 %v865, %v865
        %v868 = vpack.c.bf16 %v866, %v866
        %871 = vrot.lane.b32.xlu0 %v867, 48
        %v872 = vpop.permute.xlu0 %871
        %873 = vrot.lane.b32.xlu0 %v868, 48
        %v874 = vpop.permute.xlu0 %873
        %vm877 = vcmask 519552
        %878 = vst.msk [vmem:[#allocation3] sm:$0xf] %vm877, %v872
        %879 = vst.msk [vmem:[#allocation3 + $0x4] sm:$0xf] %vm877, %v874
        %v880 = vld [vmem:[#allocation3] sm:$0xf]
        %v881 = vld [vmem:[#allocation3 + $0x4] sm:$0xf]
        %v882 = vld [vmem:[#allocation10] sm:$0xf]
        %v883 = vld [vmem:[#allocation10 + $0x4] sm:$0xf]
        %v884 = vld [vmem:[#allocation10 + $0x8] sm:$0xf]
        %v885 = vld [vmem:[#allocation10 + $0xc] sm:$0xf]
        %v886 = vld [vmem:[#allocation10 + $0x10] sm:$0xf]
        %v887 = vld [vmem:[#allocation10 + $0x14] sm:$0xf]
        %v888 = vld [vmem:[#allocation10 + $0x18] sm:$0xf]
        %v889 = vld [vmem:[#allocation10 + $0x1c] sm:$0xf]
        %v892 = vunpack.c.l.b16 %v880
        %v893 = vunpack.c.l.b16 %v881
        %v894 = vpack.c.b16 %v893, %v892
        %v903 = vunpack.c.l.b16 %v882
        %v904 = vunpack.c.l.b16 %v883
        %v905 = vunpack.c.l.b16 %v884
        %v906 = vunpack.c.l.b16 %v885
        %v907 = vunpack.c.l.b16 %v886
        %v908 = vunpack.c.l.b16 %v887
        %v909 = vunpack.c.l.b16 %v888
        %v910 = vunpack.c.l.b16 %v889
        %v911 = vpack.c.b16 %v904, %v903
        %v912 = vpack.c.b16 %v906, %v905
        %v913 = vpack.c.b16 %v908, %v907
        %v914 = vpack.c.b16 %v910, %v909
        %v920 = vsel %vm498, %v894, 0
        %922 = vmatpush.bf16.msra.mxu0 0
        %923 = vmatpush.bf16.msra.mxu0 0
        %924 = vmatpush.bf16.msra.mxu0 0
        %925 = vmatpush.bf16.msra.mxu0 0
        %926 = vmatpush.bf16.msra.mxu0 %v914
        %927 = vmatpush.bf16.msra.mxu0 %v913
        %928 = vmatpush.bf16.msra.mxu0 %v912
        %929 = vmatpush.bf16.msra.mxu0 %v911
        %930 = vmatmul.bf16.gmra.mxu0 %v920
        %v931 = vpop.f32.mrf.mxu0
        %v932 = vadd.f32 0.0, %v931
        %v933 = vpop.f32.mrf.mxu0
        %v934 = vadd.f32 0.0, %v933
        %935 = vdwg.mxu0
        %v936 = vadd.f32 %v459, %v932
        %v937 = vadd.f32 %v460, %v934
        %v938 = vld [vmem:[%s6] sm:$0x1]
        %v939 = vld [vmem:[%s7] sm:$0x1]
        %v940 = vsel %vm498, %v936, 0.0
        %941 = vadd.xlane.f32.xlu0 %v940
        %v942 = vpop.xlane.xlu0 %941
        %v943 = vsel %vm498, %v937, 0.0
        %944 = vadd.xlane.f32.xlu0 %v943
        %v945 = vpop.xlane.xlu0 %944
        %v946 = vrcp.pop 64.0
        %v947 = vmul.f32 64.0, %v946
        %v948 = vsub.f32 1.0, %v947
        %v949 = vmul.f32 %v946, %v948
        %v950 = vadd.f32 %v946, %v949
        %vm951 = vweird.f32 %v946
        %v952 = vsel %vm951, %v946, %v950
        %v953 = vmul.f32 %v942, %v952
        %v954 = vmul.f32 %v945, %v952
        %v955 = vsub.f32 %v936, %v953
        %v956 = vsub.f32 %v937, %v954
        %v957 = vmul.f32 %v955, %v955
        %v958 = vmul.f32 %v956, %v956
        %v959 = vsel %vm498, %v957, 0.0
        %960 = vadd.xlane.f32.xlu0 %v959
        %v961 = vpop.xlane.xlu0 %960
        %v962 = vsel %vm498, %v958, 0.0
        %963 = vadd.xlane.f32.xlu0 %v962
        %v964 = vpop.xlane.xlu0 %963
        %v965 = vmul.f32 %v961, %v952
        %v966 = vmul.f32 %v964, %v952
        %v967 = vadd.f32 %v965, 1e-05
        %v968 = vadd.f32 %v966, 1e-05
        %v969 = vrsqrt.pop %v967
        %v970 = vmul.f32 %v969, %v967
        %v971 = vmul.f32 %v970, %v969
        %v972 = vmul.f32 0.5, %v971
        %v973 = vsub.f32 1.5, %v972
        %v974 = vmul.f32 %v969, %v973
        %vm975 = vweird.f32 %v967
        %vm976 = vweird.f32 %v969
        %vm977 = vmor %vm975, %vm976
        %v978 = vsel %vm977, %v969, %v974
        %v979 = vrsqrt.pop %v968
        %v980 = vmul.f32 %v979, %v968
        %v981 = vmul.f32 %v980, %v979
        %v982 = vmul.f32 0.5, %v981
        %v983 = vsub.f32 1.5, %v982
        %v984 = vmul.f32 %v979, %v983
        %vm985 = vweird.f32 %v968
        %vm986 = vweird.f32 %v979
        %vm987 = vmor %vm985, %vm986
        %v988 = vsel %vm987, %v979, %v984
        %v989 = vmul.f32 %v955, %v978
        %v990 = vmul.f32 %v956, %v988
        %v992 = vperm.slane %v938, 0
        %v994 = vmul.f32 %v989, %v992
        %v995 = vmul.f32 %v990, %v992
        %v997 = vperm.slane %v939, 0
        %v999 = vadd.f32 %v994, %v997
        %v1000 = vadd.f32 %v995, %v997
        %1001 = vst.msk [vmem:[%s389] sm:$0xff] %vm498, %v999
        %1002 = vst.msk [vmem:[%s389 + $0x8] sm:$0xff] %vm498, %v1000
        %s1003 = sand.u32 %s222, 1
        %s1004 = scalar_lea.sflag [#allocation6], %s1003
        %s1005 = sand.u32 %s222, 1
        %s1006 = smul.addr %s1005, 16
        %s1007 = scalar_lea.vmem [#allocation12], %s1006
        // Predicated region
        $region73: #{tpu_custom_call.1} parent=51 // pred_check
          %p1008 = pneg %p232
        $region74: #{tpu_custom_call.1} parent=51 // pred_check_branch
          %1010 = sbr.rel (%p1008) target = $region76
        $region75: #{tpu_custom_call.1} parent=51 // pred_region
          %s1011 = smul.u32 2, %s32
          %1013 = vsyncadd %s1004, 0
          %s1014 = smul.addr %s31, 2
          %s1015 = sadd.s32 %s1011, %s1014
          %s1016 = smul.addr %s1015, 8
          %s1017 = scalar_lea.hbm %s8, %s1016
          %s1018 = sshll.u32 %s1007, 4
          %s1019 = int_to_ptr.vmem [resolvable:$true] %s1018
          %s1020 = sshll.u32 %s1017, 4
          %s1021 = int_to_ptr.hbm [resolvable:$true] %s1020
          %1026 = dma.vmem_to_hbm [thread:$0]  %s1019, 256, %s1021, %s1004, 128, 128, 8
        $region76: #{tpu_custom_call.1} parent=51 // pred_fallthru
          _
      $region52: #{tpu_custom_call.1} parent=5 // pred_fallthru
        _
      %p1027 = scmp.le.s32.totalorder 2, %s22
      // Predicated region
      $region77: #{tpu_custom_call.1} parent=5 // pred_check
        %p1028 = pneg %p1027
      $region78: #{tpu_custom_call.1} parent=5 // pred_check_branch
        %1030 = sbr.rel (%p1028) target = $region80
      $region79: #{tpu_custom_call.1} parent=5 // pred_region
        %s1031 = ssub.s32 %s22, 2
        // Predicated region
        $region81: #{tpu_custom_call.1} parent=79 // pred_check
          %p1032 = pneg %p238
        $region82: #{tpu_custom_call.1} parent=79 // pred_check_branch
          %1034 = sbr.rel (%p1032) target = $region84
        $region83: #{tpu_custom_call.1} parent=79 // pred_region
          %s1035 = sand.u32 %s223, 1
          %s1036 = scalar_lea.sflag [#allocation6], %s1035
          %s1037 = sand.u32 %s223, 1
          %s1038 = smul.addr %s1037, 16
          %s1039 = scalar_lea.vmem [#allocation12], %s1038
          %1041 = dma.done %s1036, 256
        $region84: #{tpu_custom_call.1} parent=79 // pred_fallthru
          _
      $region80: #{tpu_custom_call.1} parent=5 // pred_fallthru
        _
    $region6: #{tpu_custom_call.1} parent=1 // loop_footer
      %s26 = sadd.s32 1, %s22
    $region7: #{tpu_custom_call.1} parent=1 // loop_footer_branch
      %21 = sbr.rel target = $region3
    $region8: #{tpu_custom_call.1} parent=1 // loop_exit
      _
    %1042 = vsyncpa [#allocation5], 1
    %s1043 = scalar_lea.sflag [#allocation5], 1
    %1044 = vsyncpa %s1043, 1
    %1045 = vsyncpa [#allocation8], 1
    %1046 = vsyncpa [#allocation11], 1
    %1047 = vsyncpa [#allocation6], 1
    %s1048 = scalar_lea.sflag [#allocation6], 1
    %1049 = vsyncpa %s1048, 1

</llo_original>
